<compile_context>
chip_gen: v7x
topology: tpu7x:2x2x1
jax: 0.10.0
libtpu: 0.0.40
codegen_flags: <defaults>
</compile_context>

<pallas_src>
import functools

import jax
import jax.numpy as jnp
from jax import lax
from jax.experimental import pallas as pl
from jax.experimental.pallas import tpu as pltpu


def lstm_sentiment_kernel(gx_ref, w_hh_ref, w_out_ref, b_out_ref, out_ref,
                          *, num_labels):
    """One batch tile: full LSTM recurrence + hidden2label + masked log_softmax.

    gx_ref   : (S, bt, 4H) f32  -- precomputed x_t @ W_ih + (b_ih + b_hh)
    w_hh_ref : (H, 4H)    bf16  -- recurrent weights (resident)
    w_out_ref: (H, Lp)    bf16  -- label projection, lane-padded to Lp (=128)
    b_out_ref: (1, Lp)    f32
    out_ref  : (bt, Lp)   f32   -- log-probs, valid in [:, :num_labels]
    """
    S, bt, G = gx_ref.shape
    H = G // 4

    w_hh = w_hh_ref[...]  # load once; reused every timestep

    def step(t, carry):
        h, c = carry
        # Recurrent projection only -- the input projection was hoisted out of the loop.
        gates = gx_ref[t] + jnp.dot(h.astype(w_hh.dtype), w_hh,
                                    preferred_element_type=jnp.float32)
        # Two full-vreg EUP passes over (bt, 4H), then pick per-gate slices.
        sig = jax.nn.sigmoid(gates)
        tah = jnp.tanh(gates)
        i_g = sig[:, 0 * H:1 * H]
        f_g = sig[:, 1 * H:2 * H]
        g_g = tah[:, 2 * H:3 * H]
        o_g = sig[:, 3 * H:4 * H]
        c_new = f_g * c + i_g * g_g
        h_new = o_g * jnp.tanh(c_new)
        return h_new, c_new

    h0 = jnp.zeros((bt, H), jnp.float32)
    c0 = jnp.zeros((bt, H), jnp.float32)
    h, _ = lax.fori_loop(0, S, step, (h0, c0), unroll=True)

    # hidden2label on the final hidden state; lane-dense (Lp = 128) output slab.
    y = (jnp.dot(h.astype(w_out_ref.dtype), w_out_ref[...],
                 preferred_element_type=jnp.float32) + b_out_ref[...])
    col = lax.broadcasted_iota(jnp.int32, y.shape, 1)
    y = jnp.where(col < num_labels, y, -1e30)       # mask padded label lanes
    m = jnp.max(y, axis=-1, keepdims=True)
    z = y - m
    lse = jnp.log(jnp.sum(jnp.exp(z), axis=-1, keepdims=True))
    out_ref[...] = (z - lse).astype(out_ref.dtype)


def lstm_sentiment_forward(sentence, params, *, compute_dtype=jnp.bfloat16):
    """sentence: (seq_len, batch) int32 token ids (seq-first, PyTorch LSTM convention)."""
    emb = params["embeddings"]      # (V, E)  f32
    w_ih = params["w_ih"]           # (E, 4H) f32, pre-transposed vs PyTorch
    w_hh = params["w_hh"]           # (H, 4H) f32
    b = params["b"]                 # (1, 4H) f32 = b_ih + b_hh
    w_out = params["w_out"]         # (H, L)  f32
    b_out = params["b_out"]         # (1, L)  f32

    S, B = sentence.shape
    E = emb.shape[1]
    H = w_hh.shape[0]
    L = w_out.shape[1]
    LANES = 128
    Lp = max(LANES, ((L + LANES - 1) // LANES) * LANES)

    # Embedding gather + hoisted input projection (one big matmul, bias folded in).
    # TODO(synk): fuse the gather into the kernel via scalar-prefetched token ids for
    # very large embedding dims / long sequences.
    x = jnp.take(emb, sentence, axis=0)                                    # (S, B, E)
    gx = jnp.einsum("sbe,eg->sbg", x.astype(compute_dtype),
                    w_ih.astype(compute_dtype),
                    preferred_element_type=jnp.float32) + b                # (S, B, 4H) f32

    # Lane-pad the label projection so the output store is lane-dense.
    w_out_p = jnp.zeros((H, Lp), compute_dtype).at[:, :L].set(w_out.astype(compute_dtype))
    b_out_p = jnp.zeros((1, Lp), jnp.float32).at[:, :L].set(b_out)

    # Batch tile = parallel grid axis (v7x: both TensorCores take batch tiles).
    bt = B
    for cand in (128, 64, 32, 16, 8):
        if B % cand == 0:
            bt = cand
            break
    n_tiles = B // bt

    grid_spec = pltpu.PrefetchScalarGridSpec(
        num_scalar_prefetch=0,
        grid=(n_tiles,),
        in_specs=[
            pl.BlockSpec((S, bt, 4 * H), lambda i: (0, i, 0)),   # gates_x tile
            pl.BlockSpec((H, 4 * H), lambda i: (0, 0)),          # W_hh (grid-invariant)
            pl.BlockSpec((H, Lp), lambda i: (0, 0)),             # W_out (grid-invariant)
            pl.BlockSpec((1, Lp), lambda i: (0, 0)),             # b_out
        ],
        out_specs=pl.BlockSpec((bt, Lp), lambda i: (i, 0)),
    )

    out = pl.pallas_call(
        functools.partial(lstm_sentiment_kernel, num_labels=L),
        out_shape=jax.ShapeDtypeStruct((B, Lp), jnp.float32),
        grid_spec=grid_spec,
        compiler_params=pltpu.CompilerParams(
            dimension_semantics=("parallel",)),
    )(gx, w_hh.astype(compute_dtype), w_out_p, b_out_p)

    return out[:, :L]


def init_params(key, vocab_size, embedding_dim, hidden_dim, label_size):
    ks = jax.random.split(key, 7)
    s = 1.0 / jnp.sqrt(hidden_dim)
    return {
        "embeddings": jax.random.normal(ks[0], (vocab_size, embedding_dim), jnp.float32),
        # stored transposed relative to PyTorch (4H, E) -> (E, 4H); gate order [i, f, g, o]
        "w_ih": jax.random.uniform(ks[1], (embedding_dim, 4 * hidden_dim), jnp.float32, -s, s),
        "w_hh": jax.random.uniform(ks[2], (hidden_dim, 4 * hidden_dim), jnp.float32, -s, s),
        # b = b_ih + b_hh
        "b": (jax.random.uniform(ks[3], (1, 4 * hidden_dim), jnp.float32, -s, s)
              + jax.random.uniform(ks[4], (1, 4 * hidden_dim), jnp.float32, -s, s)),
        "w_out": jax.random.uniform(ks[5], (hidden_dim, label_size), jnp.float32, -s, s),
        "b_out": jax.random.uniform(ks[6], (1, label_size), jnp.float32, -s, s),
    }


if __name__ == "__main__":
    seq_len, batch = 8, 2
    vocab_size, embedding_dim, hidden_dim, label_size = 100, 32, 32, 4

    key = jax.random.PRNGKey(0)
    k_tok, k_par = jax.random.split(key)
    sentence = jax.random.randint(k_tok, (seq_len, batch), 0, vocab_size, dtype=jnp.int32)
    params = init_params(k_par, vocab_size, embedding_dim, hidden_dim, label_size)

    log_probs = lstm_sentiment_forward(sentence, params)
    jax.block_until_ready(log_probs)
    assert log_probs.shape == (batch, label_size)
    print("KERNEL_OK")
</pallas_src>

<mosaic_0001>
module attributes {stable_mosaic.version = 11 : i64} {
  func.func @lstm_sentiment_kernel(%arg0: i32, %arg1: memref<8x2x128xf32, #tpu.memory_space<vmem>>, %arg2: memref<32x128xbf16, #tpu.memory_space<vmem>>, %arg3: memref<32x128xbf16, #tpu.memory_space<vmem>>, %arg4: memref<1x128xf32, #tpu.memory_space<vmem>>, %arg5: memref<2x128xf32, #tpu.memory_space<vmem>>) attributes {dimension_semantics = [#tpu.dimension_semantics<parallel>], iteration_bounds = array<i64: 1>, scalar_prefetch = 0 : i64, scratch_operands = 0 : i64, tpu.core_type = #tpu.core_type<tc>, window_params = [{transform_indices = @transform_0, window_bounds = array<i64: 8, 2, 128>}, {pipeline_mode = #tpu.pipeline_mode<synchronous>, transform_indices = @transform_1, window_bounds = array<i64: 32, 128>}, {pipeline_mode = #tpu.pipeline_mode<synchronous>, transform_indices = @transform_2, window_bounds = array<i64: 32, 128>}, {pipeline_mode = #tpu.pipeline_mode<synchronous>, transform_indices = @transform_3, window_bounds = array<i64: 1, 128>}, {transform_indices = @transform_4, window_bounds = array<i64: 2, 128>}]} {
    %c0 = arith.constant 0 : index
    %c0_0 = arith.constant 0 : index
    %0 = vector.load %arg2[%c0, %c0_0] : memref<32x128xbf16, #tpu.memory_space<vmem>>, vector<32x128xbf16>
    %cst = arith.constant 0.000000e+00 : f32
    %1 = vector.broadcast %cst : f32 to vector<2x32xf32>
    %cst_1 = arith.constant 0.000000e+00 : f32
    %2 = vector.broadcast %cst_1 : f32 to vector<2x32xf32>
    %c0_i32 = arith.constant 0 : i32
    %3 = arith.index_cast %c0_i32 : i32 to index
    %c0_2 = arith.constant 0 : index
    %c0_3 = arith.constant 0 : index
    %4 = vector.load %arg1[%3, %c0_2, %c0_3] : memref<8x2x128xf32, #tpu.memory_space<vmem>>, vector<1x2x128xf32>
    %5 = vector.shape_cast %4 : vector<1x2x128xf32> to vector<2x128xf32>
    %6 = arith.truncf %1 : vector<2x32xf32> to vector<2x32xbf16>
    %cst_4 = arith.constant dense<0.000000e+00> : vector<2x128xf32>
    %7 = tpu.matmul %6, %0, %cst_4 {dimension_numbers = #tpu.dot_dimension_numbers<[1], [0], [0], [1], [0, 0, 1, 1], [], []>} : vector<2x32xbf16>, vector<32x128xbf16>, vector<2x128xf32> -> vector<2x128xf32>
    %8 = arith.addf %5, %7 : vector<2x128xf32>
    %9 = arith.negf %8 : vector<2x128xf32>
    %10 = math.exp %9 : vector<2x128xf32>
    %cst_5 = arith.constant 1.000000e+00 : f32
    %11 = vector.broadcast %cst_5 : f32 to vector<2x128xf32>
    %12 = arith.addf %11, %10 : vector<2x128xf32>
    %13 = arith.divf %11, %12 : vector<2x128xf32>
    %14 = math.tanh %8 : vector<2x128xf32>
    %15 = vector.extract_strided_slice %13 {offsets = [0, 0], sizes = [2, 32], strides = [1, 1]} : vector<2x128xf32> to vector<2x32xf32>
    %16 = vector.extract_strided_slice %13 {offsets = [0, 32], sizes = [2, 32], strides = [1, 1]} : vector<2x128xf32> to vector<2x32xf32>
    %17 = vector.extract_strided_slice %14 {offsets = [0, 64], sizes = [2, 32], strides = [1, 1]} : vector<2x128xf32> to vector<2x32xf32>
    %18 = vector.extract_strided_slice %13 {offsets = [0, 96], sizes = [2, 32], strides = [1, 1]} : vector<2x128xf32> to vector<2x32xf32>
    %19 = arith.mulf %16, %2 : vector<2x32xf32>
    %20 = arith.mulf %15, %17 : vector<2x32xf32>
    %21 = arith.addf %19, %20 : vector<2x32xf32>
    %22 = math.tanh %21 : vector<2x32xf32>
    %23 = arith.mulf %18, %22 : vector<2x32xf32>
    %c1_i32 = arith.constant 1 : i32
    %24 = arith.index_cast %c1_i32 : i32 to index
    %c0_6 = arith.constant 0 : index
    %c0_7 = arith.constant 0 : index
    %25 = vector.load %arg1[%24, %c0_6, %c0_7] : memref<8x2x128xf32, #tpu.memory_space<vmem>>, vector<1x2x128xf32>
    %26 = vector.shape_cast %25 : vector<1x2x128xf32> to vector<2x128xf32>
    %27 = arith.truncf %23 : vector<2x32xf32> to vector<2x32xbf16>
    %cst_8 = arith.constant dense<0.000000e+00> : vector<2x128xf32>
    %28 = tpu.matmul %27, %0, %cst_8 {dimension_numbers = #tpu.dot_dimension_numbers<[1], [0], [0], [1], [0, 0, 1, 1], [], []>} : vector<2x32xbf16>, vector<32x128xbf16>, vector<2x128xf32> -> vector<2x128xf32>
    %29 = arith.addf %26, %28 : vector<2x128xf32>
    %30 = arith.negf %29 : vector<2x128xf32>
    %31 = math.exp %30 : vector<2x128xf32>
    %cst_9 = arith.constant 1.000000e+00 : f32
    %32 = vector.broadcast %cst_9 : f32 to vector<2x128xf32>
    %33 = arith.addf %32, %31 : vector<2x128xf32>
    %34 = arith.divf %32, %33 : vector<2x128xf32>
    %35 = math.tanh %29 : vector<2x128xf32>
    %36 = vector.extract_strided_slice %34 {offsets = [0, 0], sizes = [2, 32], strides = [1, 1]} : vector<2x128xf32> to vector<2x32xf32>
    %37 = vector.extract_strided_slice %34 {offsets = [0, 32], sizes = [2, 32], strides = [1, 1]} : vector<2x128xf32> to vector<2x32xf32>
    %38 = vector.extract_strided_slice %35 {offsets = [0, 64], sizes = [2, 32], strides = [1, 1]} : vector<2x128xf32> to vector<2x32xf32>
    %39 = vector.extract_strided_slice %34 {offsets = [0, 96], sizes = [2, 32], strides = [1, 1]} : vector<2x128xf32> to vector<2x32xf32>
    %40 = arith.mulf %37, %21 : vector<2x32xf32>
    %41 = arith.mulf %36, %38 : vector<2x32xf32>
    %42 = arith.addf %40, %41 : vector<2x32xf32>
    %43 = math.tanh %42 : vector<2x32xf32>
    %44 = arith.mulf %39, %43 : vector<2x32xf32>
    %c2_i32 = arith.constant 2 : i32
    %45 = arith.index_cast %c2_i32 : i32 to index
    %c0_10 = arith.constant 0 : index
    %c0_11 = arith.constant 0 : index
    %46 = vector.load %arg1[%45, %c0_10, %c0_11] : memref<8x2x128xf32, #tpu.memory_space<vmem>>, vector<1x2x128xf32>
    %47 = vector.shape_cast %46 : vector<1x2x128xf32> to vector<2x128xf32>
    %48 = arith.truncf %44 : vector<2x32xf32> to vector<2x32xbf16>
    %cst_12 = arith.constant dense<0.000000e+00> : vector<2x128xf32>
    %49 = tpu.matmul %48, %0, %cst_12 {dimension_numbers = #tpu.dot_dimension_numbers<[1], [0], [0], [1], [0, 0, 1, 1], [], []>} : vector<2x32xbf16>, vector<32x128xbf16>, vector<2x128xf32> -> vector<2x128xf32>
    %50 = arith.addf %47, %49 : vector<2x128xf32>
    %51 = arith.negf %50 : vector<2x128xf32>
    %52 = math.exp %51 : vector<2x128xf32>
    %cst_13 = arith.constant 1.000000e+00 : f32
    %53 = vector.broadcast %cst_13 : f32 to vector<2x128xf32>
    %54 = arith.addf %53, %52 : vector<2x128xf32>
    %55 = arith.divf %53, %54 : vector<2x128xf32>
    %56 = math.tanh %50 : vector<2x128xf32>
    %57 = vector.extract_strided_slice %55 {offsets = [0, 0], sizes = [2, 32], strides = [1, 1]} : vector<2x128xf32> to vector<2x32xf32>
    %58 = vector.extract_strided_slice %55 {offsets = [0, 32], sizes = [2, 32], strides = [1, 1]} : vector<2x128xf32> to vector<2x32xf32>
    %59 = vector.extract_strided_slice %56 {offsets = [0, 64], sizes = [2, 32], strides = [1, 1]} : vector<2x128xf32> to vector<2x32xf32>
    %60 = vector.extract_strided_slice %55 {offsets = [0, 96], sizes = [2, 32], strides = [1, 1]} : vector<2x128xf32> to vector<2x32xf32>
    %61 = arith.mulf %58, %42 : vector<2x32xf32>
    %62 = arith.mulf %57, %59 : vector<2x32xf32>
    %63 = arith.addf %61, %62 : vector<2x32xf32>
    %64 = math.tanh %63 : vector<2x32xf32>
    %65 = arith.mulf %60, %64 : vector<2x32xf32>
    %c3_i32 = arith.constant 3 : i32
    %66 = arith.index_cast %c3_i32 : i32 to index
    %c0_14 = arith.constant 0 : index
    %c0_15 = arith.constant 0 : index
    %67 = vector.load %arg1[%66, %c0_14, %c0_15] : memref<8x2x128xf32, #tpu.memory_space<vmem>>, vector<1x2x128xf32>
    %68 = vector.shape_cast %67 : vector<1x2x128xf32> to vector<2x128xf32>
    %69 = arith.truncf %65 : vector<2x32xf32> to vector<2x32xbf16>
    %cst_16 = arith.constant dense<0.000000e+00> : vector<2x128xf32>
    %70 = tpu.matmul %69, %0, %cst_16 {dimension_numbers = #tpu.dot_dimension_numbers<[1], [0], [0], [1], [0, 0, 1, 1], [], []>} : vector<2x32xbf16>, vector<32x128xbf16>, vector<2x128xf32> -> vector<2x128xf32>
    %71 = arith.addf %68, %70 : vector<2x128xf32>
    %72 = arith.negf %71 : vector<2x128xf32>
    %73 = math.exp %72 : vector<2x128xf32>
    %cst_17 = arith.constant 1.000000e+00 : f32
    %74 = vector.broadcast %cst_17 : f32 to vector<2x128xf32>
    %75 = arith.addf %74, %73 : vector<2x128xf32>
    %76 = arith.divf %74, %75 : vector<2x128xf32>
    %77 = math.tanh %71 : vector<2x128xf32>
    %78 = vector.extract_strided_slice %76 {offsets = [0, 0], sizes = [2, 32], strides = [1, 1]} : vector<2x128xf32> to vector<2x32xf32>
    %79 = vector.extract_strided_slice %76 {offsets = [0, 32], sizes = [2, 32], strides = [1, 1]} : vector<2x128xf32> to vector<2x32xf32>
    %80 = vector.extract_strided_slice %77 {offsets = [0, 64], sizes = [2, 32], strides = [1, 1]} : vector<2x128xf32> to vector<2x32xf32>
    %81 = vector.extract_strided_slice %76 {offsets = [0, 96], sizes = [2, 32], strides = [1, 1]} : vector<2x128xf32> to vector<2x32xf32>
    %82 = arith.mulf %79, %63 : vector<2x32xf32>
    %83 = arith.mulf %78, %80 : vector<2x32xf32>
    %84 = arith.addf %82, %83 : vector<2x32xf32>
    %85 = math.tanh %84 : vector<2x32xf32>
    %86 = arith.mulf %81, %85 : vector<2x32xf32>
    %c4_i32 = arith.constant 4 : i32
    %87 = arith.index_cast %c4_i32 : i32 to index
    %c0_18 = arith.constant 0 : index
    %c0_19 = arith.constant 0 : index
    %88 = vector.load %arg1[%87, %c0_18, %c0_19] : memref<8x2x128xf32, #tpu.memory_space<vmem>>, vector<1x2x128xf32>
    %89 = vector.shape_cast %88 : vector<1x2x128xf32> to vector<2x128xf32>
    %90 = arith.truncf %86 : vector<2x32xf32> to vector<2x32xbf16>
    %cst_20 = arith.constant dense<0.000000e+00> : vector<2x128xf32>
    %91 = tpu.matmul %90, %0, %cst_20 {dimension_numbers = #tpu.dot_dimension_numbers<[1], [0], [0], [1], [0, 0, 1, 1], [], []>} : vector<2x32xbf16>, vector<32x128xbf16>, vector<2x128xf32> -> vector<2x128xf32>
    %92 = arith.addf %89, %91 : vector<2x128xf32>
    %93 = arith.negf %92 : vector<2x128xf32>
    %94 = math.exp %93 : vector<2x128xf32>
    %cst_21 = arith.constant 1.000000e+00 : f32
    %95 = vector.broadcast %cst_21 : f32 to vector<2x128xf32>
    %96 = arith.addf %95, %94 : vector<2x128xf32>
    %97 = arith.divf %95, %96 : vector<2x128xf32>
    %98 = math.tanh %92 : vector<2x128xf32>
    %99 = vector.extract_strided_slice %97 {offsets = [0, 0], sizes = [2, 32], strides = [1, 1]} : vector<2x128xf32> to vector<2x32xf32>
    %100 = vector.extract_strided_slice %97 {offsets = [0, 32], sizes = [2, 32], strides = [1, 1]} : vector<2x128xf32> to vector<2x32xf32>
    %101 = vector.extract_strided_slice %98 {offsets = [0, 64], sizes = [2, 32], strides = [1, 1]} : vector<2x128xf32> to vector<2x32xf32>
    %102 = vector.extract_strided_slice %97 {offsets = [0, 96], sizes = [2, 32], strides = [1, 1]} : vector<2x128xf32> to vector<2x32xf32>
    %103 = arith.mulf %100, %84 : vector<2x32xf32>
    %104 = arith.mulf %99, %101 : vector<2x32xf32>
    %105 = arith.addf %103, %104 : vector<2x32xf32>
    %106 = math.tanh %105 : vector<2x32xf32>
    %107 = arith.mulf %102, %106 : vector<2x32xf32>
    %c5_i32 = arith.constant 5 : i32
    %108 = arith.index_cast %c5_i32 : i32 to index
    %c0_22 = arith.constant 0 : index
    %c0_23 = arith.constant 0 : index
    %109 = vector.load %arg1[%108, %c0_22, %c0_23] : memref<8x2x128xf32, #tpu.memory_space<vmem>>, vector<1x2x128xf32>
    %110 = vector.shape_cast %109 : vector<1x2x128xf32> to vector<2x128xf32>
    %111 = arith.truncf %107 : vector<2x32xf32> to vector<2x32xbf16>
    %cst_24 = arith.constant dense<0.000000e+00> : vector<2x128xf32>
    %112 = tpu.matmul %111, %0, %cst_24 {dimension_numbers = #tpu.dot_dimension_numbers<[1], [0], [0], [1], [0, 0, 1, 1], [], []>} : vector<2x32xbf16>, vector<32x128xbf16>, vector<2x128xf32> -> vector<2x128xf32>
    %113 = arith.addf %110, %112 : vector<2x128xf32>
    %114 = arith.negf %113 : vector<2x128xf32>
    %115 = math.exp %114 : vector<2x128xf32>
    %cst_25 = arith.constant 1.000000e+00 : f32
    %116 = vector.broadcast %cst_25 : f32 to vector<2x128xf32>
    %117 = arith.addf %116, %115 : vector<2x128xf32>
    %118 = arith.divf %116, %117 : vector<2x128xf32>
    %119 = math.tanh %113 : vector<2x128xf32>
    %120 = vector.extract_strided_slice %118 {offsets = [0, 0], sizes = [2, 32], strides = [1, 1]} : vector<2x128xf32> to vector<2x32xf32>
    %121 = vector.extract_strided_slice %118 {offsets = [0, 32], sizes = [2, 32], strides = [1, 1]} : vector<2x128xf32> to vector<2x32xf32>
    %122 = vector.extract_strided_slice %119 {offsets = [0, 64], sizes = [2, 32], strides = [1, 1]} : vector<2x128xf32> to vector<2x32xf32>
    %123 = vector.extract_strided_slice %118 {offsets = [0, 96], sizes = [2, 32], strides = [1, 1]} : vector<2x128xf32> to vector<2x32xf32>
    %124 = arith.mulf %121, %105 : vector<2x32xf32>
    %125 = arith.mulf %120, %122 : vector<2x32xf32>
    %126 = arith.addf %124, %125 : vector<2x32xf32>
    %127 = math.tanh %126 : vector<2x32xf32>
    %128 = arith.mulf %123, %127 : vector<2x32xf32>
    %c6_i32 = arith.constant 6 : i32
    %129 = arith.index_cast %c6_i32 : i32 to index
    %c0_26 = arith.constant 0 : index
    %c0_27 = arith.constant 0 : index
    %130 = vector.load %arg1[%129, %c0_26, %c0_27] : memref<8x2x128xf32, #tpu.memory_space<vmem>>, vector<1x2x128xf32>
    %131 = vector.shape_cast %130 : vector<1x2x128xf32> to vector<2x128xf32>
    %132 = arith.truncf %128 : vector<2x32xf32> to vector<2x32xbf16>
    %cst_28 = arith.constant dense<0.000000e+00> : vector<2x128xf32>
    %133 = tpu.matmul %132, %0, %cst_28 {dimension_numbers = #tpu.dot_dimension_numbers<[1], [0], [0], [1], [0, 0, 1, 1], [], []>} : vector<2x32xbf16>, vector<32x128xbf16>, vector<2x128xf32> -> vector<2x128xf32>
    %134 = arith.addf %131, %133 : vector<2x128xf32>
    %135 = arith.negf %134 : vector<2x128xf32>
    %136 = math.exp %135 : vector<2x128xf32>
    %cst_29 = arith.constant 1.000000e+00 : f32
    %137 = vector.broadcast %cst_29 : f32 to vector<2x128xf32>
    %138 = arith.addf %137, %136 : vector<2x128xf32>
    %139 = arith.divf %137, %138 : vector<2x128xf32>
    %140 = math.tanh %134 : vector<2x128xf32>
    %141 = vector.extract_strided_slice %139 {offsets = [0, 0], sizes = [2, 32], strides = [1, 1]} : vector<2x128xf32> to vector<2x32xf32>
    %142 = vector.extract_strided_slice %139 {offsets = [0, 32], sizes = [2, 32], strides = [1, 1]} : vector<2x128xf32> to vector<2x32xf32>
    %143 = vector.extract_strided_slice %140 {offsets = [0, 64], sizes = [2, 32], strides = [1, 1]} : vector<2x128xf32> to vector<2x32xf32>
    %144 = vector.extract_strided_slice %139 {offsets = [0, 96], sizes = [2, 32], strides = [1, 1]} : vector<2x128xf32> to vector<2x32xf32>
    %145 = arith.mulf %142, %126 : vector<2x32xf32>
    %146 = arith.mulf %141, %143 : vector<2x32xf32>
    %147 = arith.addf %145, %146 : vector<2x32xf32>
    %148 = math.tanh %147 : vector<2x32xf32>
    %149 = arith.mulf %144, %148 : vector<2x32xf32>
    %c7_i32 = arith.constant 7 : i32
    %150 = arith.index_cast %c7_i32 : i32 to index
    %c0_30 = arith.constant 0 : index
    %c0_31 = arith.constant 0 : index
    %151 = vector.load %arg1[%150, %c0_30, %c0_31] : memref<8x2x128xf32, #tpu.memory_space<vmem>>, vector<1x2x128xf32>
    %152 = vector.shape_cast %151 : vector<1x2x128xf32> to vector<2x128xf32>
    %153 = arith.truncf %149 : vector<2x32xf32> to vector<2x32xbf16>
    %cst_32 = arith.constant dense<0.000000e+00> : vector<2x128xf32>
    %154 = tpu.matmul %153, %0, %cst_32 {dimension_numbers = #tpu.dot_dimension_numbers<[1], [0], [0], [1], [0, 0, 1, 1], [], []>} : vector<2x32xbf16>, vector<32x128xbf16>, vector<2x128xf32> -> vector<2x128xf32>
    %155 = arith.addf %152, %154 : vector<2x128xf32>
    %156 = arith.negf %155 : vector<2x128xf32>
    %157 = math.exp %156 : vector<2x128xf32>
    %cst_33 = arith.constant 1.000000e+00 : f32
    %158 = vector.broadcast %cst_33 : f32 to vector<2x128xf32>
    %159 = arith.addf %158, %157 : vector<2x128xf32>
    %160 = arith.divf %158, %159 : vector<2x128xf32>
    %161 = math.tanh %155 : vector<2x128xf32>
    %162 = vector.extract_strided_slice %160 {offsets = [0, 0], sizes = [2, 32], strides = [1, 1]} : vector<2x128xf32> to vector<2x32xf32>
    %163 = vector.extract_strided_slice %160 {offsets = [0, 32], sizes = [2, 32], strides = [1, 1]} : vector<2x128xf32> to vector<2x32xf32>
    %164 = vector.extract_strided_slice %161 {offsets = [0, 64], sizes = [2, 32], strides = [1, 1]} : vector<2x128xf32> to vector<2x32xf32>
    %165 = vector.extract_strided_slice %160 {offsets = [0, 96], sizes = [2, 32], strides = [1, 1]} : vector<2x128xf32> to vector<2x32xf32>
    %166 = arith.mulf %163, %147 : vector<2x32xf32>
    %167 = arith.mulf %162, %164 : vector<2x32xf32>
    %168 = arith.addf %166, %167 : vector<2x32xf32>
    %169 = math.tanh %168 : vector<2x32xf32>
    %170 = arith.mulf %165, %169 : vector<2x32xf32>
    %c8_i32 = arith.constant 8 : i32
    %171 = arith.truncf %170 : vector<2x32xf32> to vector<2x32xbf16>
    %c0_34 = arith.constant 0 : index
    %c0_35 = arith.constant 0 : index
    %172 = vector.load %arg3[%c0_34, %c0_35] : memref<32x128xbf16, #tpu.memory_space<vmem>>, vector<32x128xbf16>
    %cst_36 = arith.constant dense<0.000000e+00> : vector<2x128xf32>
    %173 = tpu.matmul %171, %172, %cst_36 {dimension_numbers = #tpu.dot_dimension_numbers<[1], [0], [0], [1], [0, 0, 1, 1], [], []>} : vector<2x32xbf16>, vector<32x128xbf16>, vector<2x128xf32> -> vector<2x128xf32>
    %c0_37 = arith.constant 0 : index
    %c0_38 = arith.constant 0 : index
    %174 = vector.load %arg4[%c0_37, %c0_38] : memref<1x128xf32, #tpu.memory_space<vmem>>, vector<1x128xf32>
    %175 = vector.broadcast %174 : vector<1x128xf32> to vector<2x128xf32>
    %176 = arith.addf %173, %175 : vector<2x128xf32>
    %177 = tpu.iota {dimensions = array<i32: 1>} : vector<2x128xi32>
    %c4_i32_39 = arith.constant 4 : i32
    %178 = vector.broadcast %c4_i32_39 : i32 to vector<2x128xi32>
    %179 = arith.cmpi slt, %177, %178 : vector<2x128xi32>
    %cst_40 = arith.constant -1.000000e+30 : f32
    %180 = vector.broadcast %cst_40 : f32 to vector<2x128xf32>
    %181 = arith.select %179, %176, %180 : vector<2x128xi1>, vector<2x128xf32>
    %cst_41 = arith.constant dense<0xFF800000> : vector<2xf32>
    %182 = vector.multi_reduction <maximumf>, %181, %cst_41 [1] : vector<2x128xf32> to vector<2xf32>
    %183 = vector.shape_cast %182 : vector<2xf32> to vector<2x1xf32>
    %184 = vector.broadcast %183 : vector<2x1xf32> to vector<2x128xf32>
    %185 = arith.subf %181, %184 : vector<2x128xf32>
    %186 = math.exp %185 : vector<2x128xf32>
    %cst_42 = arith.constant dense<0.000000e+00> : vector<2xf32>
    %187 = vector.multi_reduction <add>, %186, %cst_42 [1] : vector<2x128xf32> to vector<2xf32>
    %188 = vector.shape_cast %187 : vector<2xf32> to vector<2x1xf32>
    %189 = math.log %188 : vector<2x1xf32>
    %190 = vector.broadcast %189 : vector<2x1xf32> to vector<2x128xf32>
    %191 = arith.subf %185, %190 : vector<2x128xf32>
    %c0_43 = arith.constant 0 : index
    %c0_44 = arith.constant 0 : index
    %192 = vector.load %arg5[%c0_43, %c0_44] : memref<2x128xf32, #tpu.memory_space<vmem>>, vector<2x128xf32>
    tpu.vector_store %arg5[%c0_43, %c0_44], %191 {strides = array<i32>} : memref<2x128xf32, #tpu.memory_space<vmem>>, vector<2x128xf32>,
    return
  }
  func.func @transform_0(%arg0: i32) -> (i32, i32, i32) {
    %c0_i32 = arith.constant 0 : i32
    %c0_i32_0 = arith.constant 0 : i32
    %c0_i32_1 = arith.constant 0 : i32
    return %c0_i32, %arg0, %c0_i32_0 : i32, i32, i32
  }
  func.func @transform_1(%arg0: i32) -> (i32, i32) {
    %c0_i32 = arith.constant 0 : i32
    %c0_i32_0 = arith.constant 0 : i32
    %c0_i32_1 = arith.constant 0 : i32
    return %c0_i32, %c0_i32_0 : i32, i32
  }
  func.func @transform_2(%arg0: i32) -> (i32, i32) {
    %c0_i32 = arith.constant 0 : i32
    %c0_i32_0 = arith.constant 0 : i32
    %c0_i32_1 = arith.constant 0 : i32
    return %c0_i32, %c0_i32_0 : i32, i32
  }
  func.func @transform_3(%arg0: i32) -> (i32, i32) {
    %c0_i32 = arith.constant 0 : i32
    %c0_i32_0 = arith.constant 0 : i32
    %c0_i32_1 = arith.constant 0 : i32
    return %c0_i32, %c0_i32_0 : i32, i32
  }
  func.func @transform_4(%arg0: i32) -> (i32, i32) {
    %c0_i32 = arith.constant 0 : i32
    %c0_i32_0 = arith.constant 0 : i32
    return %arg0, %c0_i32 : i32, i32
  }
}

</mosaic_0001>

<llo_original>
// kernel: tpu_custom_call.1
$region0: #{tpu_custom_call.1}
  #allocation0 [shape = 'u32[]', space=smem, size = 0x4, offset = 0x4, fixed_abs, tag = 'smem constant byte address 0x4 - core index']
  #allocation1 [shape = 'u32[144,128]{1,0:T(1,128)}', space=vmem, size = 0x12000, scoped, tag = 'internal scratch']
  %s0 = inlined_call_operand.hbm [shape: f32[8,2,128], index: 0, kind: input, shape index: {}]
  %s1 = inlined_call_operand.hbm [shape: bf16[32,128], index: 1, kind: input, shape index: {}]
  %s2 = inlined_call_operand.hbm [shape: bf16[32,128], index: 2, kind: input, shape index: {}]
  %s3 = inlined_call_operand.vmem [shape: f32[1,128], index: 3, kind: input, shape index: {}]
  %s4 = inlined_call_operand.hbm [shape: f32[2,128], index: 4, kind: output, shape index: {}]
  %s5 = sld [smem:[#allocation0]]
  $region38: #{tpu_custom_call.1} parent=0
    _
  %s7 = ssub.s32 1, %s5
  %s8 = scalar_select 0, %s7, %s5
  $region1: #{tpu_custom_call.1} parent=0
    #allocation2 [shape = 'u8[8192]{0}', space=vmem, size = 0x2000, scoped, tag = 'input window, operand 0, single buffered']
    #allocation3 [shape = 's32[1]{0}', space=sflag, size = 0x4, scoped, tag = 'scoped memory for tpu_custom_call.1']
    #allocation4 [shape = 's32[1]{0}', space=sflag, size = 0x4, scoped, tag = 'scoped memory for tpu_custom_call.1']
    #allocation5 [shape = 'u8[8192]{0}', space=vmem, size = 0x2000, scoped, tag = 'input window, operand 1, single buffered']
    #allocation6 [shape = 's32[1]{0}', space=sflag, size = 0x4, scoped, tag = 'scoped memory for tpu_custom_call.1']
    #allocation7 [shape = 'u8[8192]{0}', space=vmem, size = 0x2000, scoped, tag = 'input window, operand 2, single buffered']
    #allocation8 [shape = 'u8[1024]{0}', space=vmem, size = 0x400, scoped, tag = 'output window, operand 0, single buffered']
    %9 = vsyncpa [#allocation3], 0
    %10 = vsyncpa [#allocation6], 0
    %11 = vsyncpa [#allocation4], 0
    // Predicated region
    $region2: #{tpu_custom_call.1} parent=1 // pred_check
      _
    $region3: #{tpu_custom_call.1} parent=1 // pred_check_branch
      %13 = sbr.rel (0) target = $region5
    $region4: #{tpu_custom_call.1} parent=1 // pred_region
      %s15 = ssub.s32 256, 256
      %16 = vsyncadd [#allocation3], %s15
      %s17 = sshll.u32 [#allocation2], 4
      %s18 = int_to_ptr.vmem [resolvable:$true] %s17
      %23 = dma.hbm_to_vmem [thread:$0]  %s0, 256, %s18, [#allocation3], 32, 32, 2
    $region5: #{tpu_custom_call.1} parent=1 // pred_fallthru
      _
    // Predicated region
    $region6: #{tpu_custom_call.1} parent=1 // pred_check
      _
    $region7: #{tpu_custom_call.1} parent=1 // pred_check_branch
      %25 = sbr.rel (0) target = $region9
    $region8: #{tpu_custom_call.1} parent=1 // pred_region
      %s27 = ssub.s32 256, 256
      %28 = vsyncadd [#allocation6], %s27
      %s29 = sshll.u32 [#allocation5], 4
      %s30 = int_to_ptr.vmem [resolvable:$true] %s29
      %35 = dma.hbm_to_vmem [thread:$0]  %s1, 256, %s30, [#allocation6], 64, 64, 4
    $region9: #{tpu_custom_call.1} parent=1 // pred_fallthru
      _
    // Predicated region
    $region10: #{tpu_custom_call.1} parent=1 // pred_check
      _
    $region11: #{tpu_custom_call.1} parent=1 // pred_check_branch
      %37 = sbr.rel (0) target = $region13
    $region12: #{tpu_custom_call.1} parent=1 // pred_region
      %s39 = ssub.s32 256, 256
      %40 = vsyncadd [#allocation6], %s39
      %s41 = sshll.u32 [#allocation7], 4
      %s42 = int_to_ptr.vmem [resolvable:$true] %s41
      %47 = dma.hbm_to_vmem [thread:$0]  %s2, 256, %s42, [#allocation6], 64, 64, 4
    $region13: #{tpu_custom_call.1} parent=1 // pred_fallthru
      _
    // Predicated region
    $region14: #{tpu_custom_call.1} parent=1 // pred_check
      _
    $region15: #{tpu_custom_call.1} parent=1 // pred_check_branch
      %49 = sbr.rel (0) target = $region17
    $region16: #{tpu_custom_call.1} parent=1 // pred_region
      _
    $region17: #{tpu_custom_call.1} parent=1 // pred_fallthru
      _
    // Predicated region
    $region18: #{tpu_custom_call.1} parent=1 // pred_check
      _
    $region19: #{tpu_custom_call.1} parent=1 // pred_check_branch
      %51 = sbr.rel (0) target = $region21
    $region20: #{tpu_custom_call.1} parent=1 // pred_region
      %52 = dma.done [#allocation3], 256
    $region21: #{tpu_custom_call.1} parent=1 // pred_fallthru
      _
    // Predicated region
    $region22: #{tpu_custom_call.1} parent=1 // pred_check
      _
    $region23: #{tpu_custom_call.1} parent=1 // pred_check_branch
      %54 = sbr.rel (0) target = $region25
    $region24: #{tpu_custom_call.1} parent=1 // pred_region
      %55 = dma.done [#allocation6], 256
    $region25: #{tpu_custom_call.1} parent=1 // pred_fallthru
      _
    // Predicated region
    $region26: #{tpu_custom_call.1} parent=1 // pred_check
      _
    $region27: #{tpu_custom_call.1} parent=1 // pred_check_branch
      %57 = sbr.rel (0) target = $region29
    $region28: #{tpu_custom_call.1} parent=1 // pred_region
      %58 = dma.done [#allocation6], 256
    $region29: #{tpu_custom_call.1} parent=1 // pred_fallthru
      _
    %v60 = vld [vmem:[#allocation5] sm:$0xf]
    %v61 = vld [vmem:[#allocation5 + $0x4] sm:$0xf]
    %v62 = vld [vmem:[#allocation5 + $0x8] sm:$0xf]
    %v63 = vld [vmem:[#allocation5 + $0xc] sm:$0xf]
    %v64 = vld [vmem:[#allocation2] sm:$0x3]
    %v69 = vunpack.c.l.b16 %v60
    %v70 = vunpack.c.l.b16 %v61
    %v71 = vunpack.c.l.b16 %v62
    %v72 = vunpack.c.l.b16 %v63
    %v73 = vpack.c.b16 %v70, %v69
    %v74 = vpack.c.b16 %v72, %v71
    %vm77 = vcmask 261120
    %v79 = vsel %vm77, 0, 0
    %81 = vmatprep.subr.bf16.mxu0 0
    %82 = vmatpush1.bf16.msra.mxu0 %v73
    %83 = vmatprep.subr.bf16.mxu0 0
    %84 = vmatpush1.bf16.msra.mxu0 %v74
    %85 = vmatprep.subr.bf16.mxu0 0
    %86 = vmatpush1.bf16.msra.mxu0 0
    %87 = vmatprep.subr.bf16.mxu0 0
    %88 = vmatpush1.bf16.msra.mxu0 0
    %89 = vmatprep.subr.bf16.mxu0 0
    %90 = vmatpush1.bf16.msra.mxu0 0
    %91 = vmatprep.subr.bf16.mxu0 0
    %92 = vmatpush1.bf16.msra.mxu0 0
    %93 = vmatprep.subr.bf16.mxu0 0
    %94 = vmatpush1.bf16.msra.mxu0 0
    %95 = vmatprep.subr.bf16.mxu0 0
    %96 = vmatpush1.bf16.msra.mxu0 0
    %97 = vmatprep.subr.bf16.mxu0 0
    %98 = vmatpush1.bf16.msra.mxu0 0
    %99 = vmatprep.subr.bf16.mxu0 0
    %100 = vmatpush1.bf16.msra.mxu0 0
    %101 = vmatprep.subr.bf16.mxu0 0
    %102 = vmatpush1.bf16.msra.mxu0 0
    %103 = vmatprep.subr.bf16.mxu0 0
    %104 = vmatpush1.bf16.msra.mxu0 0
    %105 = vmatprep.subr.bf16.mxu0 0
    %106 = vmatpush1.bf16.msra.mxu0 0
    %107 = vmatprep.subr.bf16.mxu0 0
    %108 = vmatpush1.bf16.msra.mxu0 0
    %109 = vmatprep.subr.bf16.mxu0 0
    %110 = vmatpush1.bf16.msra.mxu0 0
    %111 = vmatprep.subr.bf16.mxu0 0
    %112 = vmatpush1.bf16.msra.mxu0 0
    %113 = vmatprep.mubr.bf16.mxu0 0
    %114 = vmatmul.mubr.bf16.gmra.mrb[0].mxu0 %v79
    %v115 = vpop.f32.mrb[0].mxu0
    %v116 = vadd.f32 0.0, %v115
    %v117 = vpop.f32.mrb[0].mxu0
    %v118 = vpop.f32.mrb[0].mxu0
    %v119 = vpop.f32.mrb[0].mxu0
    %120 = vdwg.mxu0
    %v121 = vadd.f32 %v64, %v116
    %v122 = vxor.u32 %v121, 2147483648
    %v123 = vmul.f32 %v122, 1.442695
    %v124 = vpow.pop %v123
    %v125 = vadd.f32 %v124, 1.0
    %v126 = vrcp.pop %v125
    %v127 = vmul.f32 1.0, %v126
    %v128 = vtanh.pop %v121
    %v129 = vmul.f32 %v127, 0.0
    %131 = vrot.lane.b32.xlu0 %v128, 64
    %v132 = vpop.permute.xlu0 %131
    %v134 = vmul.f32 %v127, %v132
    %136 = vrot.lane.b32.xlu0 %v134, 32
    %v137 = vpop.permute.xlu0 %136
    %v139 = vadd.f32 %v129, %v137
    %v140 = vtanh.pop %v139
    %142 = vrot.lane.b32.xlu0 %v140, 64
    %v143 = vpop.permute.xlu0 %142
    %v145 = vmul.f32 %v127, %v143
    %s146 = scalar_lea.vmem [#allocation2], 2
    %v147 = vld [vmem:[%s146] sm:$0x3]
    %v148 = vpack.c.bf16 %v145, %v145
    %150 = vrot.lane.b32.xlu0 %v148, 32
    %v151 = vpop.permute.xlu0 %150
    %v153 = vsel %vm77, %v151, 0
    %155 = vmatprep.subr.bf16.mxu0 0
    %156 = vmatpush1.bf16.msra.mxu0 %v73
    %157 = vmatprep.subr.bf16.mxu0 0
    %158 = vmatpush1.bf16.msra.mxu0 %v74
    %159 = vmatprep.subr.bf16.mxu0 0
    %160 = vmatpush1.bf16.msra.mxu0 0
    %161 = vmatprep.subr.bf16.mxu0 0
    %162 = vmatpush1.bf16.msra.mxu0 0
    %163 = vmatprep.subr.bf16.mxu0 0
    %164 = vmatpush1.bf16.msra.mxu0 0
    %165 = vmatprep.subr.bf16.mxu0 0
    %166 = vmatpush1.bf16.msra.mxu0 0
    %167 = vmatprep.subr.bf16.mxu0 0
    %168 = vmatpush1.bf16.msra.mxu0 0
    %169 = vmatprep.subr.bf16.mxu0 0
    %170 = vmatpush1.bf16.msra.mxu0 0
    %171 = vmatprep.subr.bf16.mxu0 0
    %172 = vmatpush1.bf16.msra.mxu0 0
    %173 = vmatprep.subr.bf16.mxu0 0
    %174 = vmatpush1.bf16.msra.mxu0 0
    %175 = vmatprep.subr.bf16.mxu0 0
    %176 = vmatpush1.bf16.msra.mxu0 0
    %177 = vmatprep.subr.bf16.mxu0 0
    %178 = vmatpush1.bf16.msra.mxu0 0
    %179 = vmatprep.subr.bf16.mxu0 0
    %180 = vmatpush1.bf16.msra.mxu0 0
    %181 = vmatprep.subr.bf16.mxu0 0
    %182 = vmatpush1.bf16.msra.mxu0 0
    %183 = vmatprep.subr.bf16.mxu0 0
    %184 = vmatpush1.bf16.msra.mxu0 0
    %185 = vmatprep.subr.bf16.mxu0 0
    %186 = vmatpush1.bf16.msra.mxu0 0
    %187 = vmatprep.mubr.bf16.mxu0 0
    %188 = vmatmul.mubr.bf16.gmra.mrb[0].mxu0 %v153
    %v189 = vpop.f32.mrb[0].mxu0
    %v190 = vadd.f32 0.0, %v189
    %v191 = vpop.f32.mrb[0].mxu0
    %v192 = vpop.f32.mrb[0].mxu0
    %v193 = vpop.f32.mrb[0].mxu0
    %194 = vdwg.mxu0
    %v195 = vadd.f32 %v147, %v190
    %v196 = vxor.u32 %v195, 2147483648
    %v197 = vmul.f32 %v196, 1.442695
    %v198 = vpow.pop %v197
    %v199 = vadd.f32 %v198, 1.0
    %v200 = vrcp.pop %v199
    %v201 = vmul.f32 1.0, %v200
    %v202 = vtanh.pop %v195
    %v203 = vmul.f32 %v201, %v139
    %205 = vrot.lane.b32.xlu0 %v202, 64
    %v206 = vpop.permute.xlu0 %205
    %v208 = vmul.f32 %v201, %v206
    %210 = vrot.lane.b32.xlu0 %v208, 32
    %v211 = vpop.permute.xlu0 %210
    %v213 = vadd.f32 %v203, %v211
    %v214 = vtanh.pop %v213
    %216 = vrot.lane.b32.xlu0 %v214, 64
    %v217 = vpop.permute.xlu0 %216
    %v219 = vmul.f32 %v201, %v217
    %s220 = scalar_lea.vmem [#allocation2], 4
    %v221 = vld [vmem:[%s220] sm:$0x3]
    %v222 = vpack.c.bf16 %v219, %v219
    %224 = vrot.lane.b32.xlu0 %v222, 32
    %v225 = vpop.permute.xlu0 %224
    %v227 = vsel %vm77, %v225, 0
    %229 = vmatprep.subr.bf16.mxu0 0
    %230 = vmatpush1.bf16.msra.mxu0 %v73
    %231 = vmatprep.subr.bf16.mxu0 0
    %232 = vmatpush1.bf16.msra.mxu0 %v74
    %233 = vmatprep.subr.bf16.mxu0 0
    %234 = vmatpush1.bf16.msra.mxu0 0
    %235 = vmatprep.subr.bf16.mxu0 0
    %236 = vmatpush1.bf16.msra.mxu0 0
    %237 = vmatprep.subr.bf16.mxu0 0
    %238 = vmatpush1.bf16.msra.mxu0 0
    %239 = vmatprep.subr.bf16.mxu0 0
    %240 = vmatpush1.bf16.msra.mxu0 0
    %241 = vmatprep.subr.bf16.mxu0 0
    %242 = vmatpush1.bf16.msra.mxu0 0
    %243 = vmatprep.subr.bf16.mxu0 0
    %244 = vmatpush1.bf16.msra.mxu0 0
    %245 = vmatprep.subr.bf16.mxu0 0
    %246 = vmatpush1.bf16.msra.mxu0 0
    %247 = vmatprep.subr.bf16.mxu0 0
    %248 = vmatpush1.bf16.msra.mxu0 0
    %249 = vmatprep.subr.bf16.mxu0 0
    %250 = vmatpush1.bf16.msra.mxu0 0
    %251 = vmatprep.subr.bf16.mxu0 0
    %252 = vmatpush1.bf16.msra.mxu0 0
    %253 = vmatprep.subr.bf16.mxu0 0
    %254 = vmatpush1.bf16.msra.mxu0 0
    %255 = vmatprep.subr.bf16.mxu0 0
    %256 = vmatpush1.bf16.msra.mxu0 0
    %257 = vmatprep.subr.bf16.mxu0 0
    %258 = vmatpush1.bf16.msra.mxu0 0
    %259 = vmatprep.subr.bf16.mxu0 0
    %260 = vmatpush1.bf16.msra.mxu0 0
    %261 = vmatprep.mubr.bf16.mxu0 0
    %262 = vmatmul.mubr.bf16.gmra.mrb[0].mxu0 %v227
    %v263 = vpop.f32.mrb[0].mxu0
    %v264 = vadd.f32 0.0, %v263
    %v265 = vpop.f32.mrb[0].mxu0
    %v266 = vpop.f32.mrb[0].mxu0
    %v267 = vpop.f32.mrb[0].mxu0
    %268 = vdwg.mxu0
    %v269 = vadd.f32 %v221, %v264
    %v270 = vxor.u32 %v269, 2147483648
    %v271 = vmul.f32 %v270, 1.442695
    %v272 = vpow.pop %v271
    %v273 = vadd.f32 %v272, 1.0
    %v274 = vrcp.pop %v273
    %v275 = vmul.f32 1.0, %v274
    %v276 = vtanh.pop %v269
    %v277 = vmul.f32 %v275, %v213
    %279 = vrot.lane.b32.xlu0 %v276, 64
    %v280 = vpop.permute.xlu0 %279
    %v282 = vmul.f32 %v275, %v280
    %284 = vrot.lane.b32.xlu0 %v282, 32
    %v285 = vpop.permute.xlu0 %284
    %v287 = vadd.f32 %v277, %v285
    %v288 = vtanh.pop %v287
    %290 = vrot.lane.b32.xlu0 %v288, 64
    %v291 = vpop.permute.xlu0 %290
    %v293 = vmul.f32 %v275, %v291
    %s294 = scalar_lea.vmem [#allocation2], 6
    %v295 = vld [vmem:[%s294] sm:$0x3]
    %v296 = vpack.c.bf16 %v293, %v293
    %298 = vrot.lane.b32.xlu0 %v296, 32
    %v299 = vpop.permute.xlu0 %298
    %v301 = vsel %vm77, %v299, 0
    %303 = vmatprep.subr.bf16.mxu0 0
    %304 = vmatpush1.bf16.msra.mxu0 %v73
    %305 = vmatprep.subr.bf16.mxu0 0
    %306 = vmatpush1.bf16.msra.mxu0 %v74
    %307 = vmatprep.subr.bf16.mxu0 0
    %308 = vmatpush1.bf16.msra.mxu0 0
    %309 = vmatprep.subr.bf16.mxu0 0
    %310 = vmatpush1.bf16.msra.mxu0 0
    %311 = vmatprep.subr.bf16.mxu0 0
    %312 = vmatpush1.bf16.msra.mxu0 0
    %313 = vmatprep.subr.bf16.mxu0 0
    %314 = vmatpush1.bf16.msra.mxu0 0
    %315 = vmatprep.subr.bf16.mxu0 0
    %316 = vmatpush1.bf16.msra.mxu0 0
    %317 = vmatprep.subr.bf16.mxu0 0
    %318 = vmatpush1.bf16.msra.mxu0 0
    %319 = vmatprep.subr.bf16.mxu0 0
    %320 = vmatpush1.bf16.msra.mxu0 0
    %321 = vmatprep.subr.bf16.mxu0 0
    %322 = vmatpush1.bf16.msra.mxu0 0
    %323 = vmatprep.subr.bf16.mxu0 0
    %324 = vmatpush1.bf16.msra.mxu0 0
    %325 = vmatprep.subr.bf16.mxu0 0
    %326 = vmatpush1.bf16.msra.mxu0 0
    %327 = vmatprep.subr.bf16.mxu0 0
    %328 = vmatpush1.bf16.msra.mxu0 0
    %329 = vmatprep.subr.bf16.mxu0 0
    %330 = vmatpush1.bf16.msra.mxu0 0
    %331 = vmatprep.subr.bf16.mxu0 0
    %332 = vmatpush1.bf16.msra.mxu0 0
    %333 = vmatprep.subr.bf16.mxu0 0
    %334 = vmatpush1.bf16.msra.mxu0 0
    %335 = vmatprep.mubr.bf16.mxu0 0
    %336 = vmatmul.mubr.bf16.gmra.mrb[0].mxu0 %v301
    %v337 = vpop.f32.mrb[0].mxu0
    %v338 = vadd.f32 0.0, %v337
    %v339 = vpop.f32.mrb[0].mxu0
    %v340 = vpop.f32.mrb[0].mxu0
    %v341 = vpop.f32.mrb[0].mxu0
    %342 = vdwg.mxu0
    %v343 = vadd.f32 %v295, %v338
    %v344 = vxor.u32 %v343, 2147483648
    %v345 = vmul.f32 %v344, 1.442695
    %v346 = vpow.pop %v345
    %v347 = vadd.f32 %v346, 1.0
    %v348 = vrcp.pop %v347
    %v349 = vmul.f32 1.0, %v348
    %v350 = vtanh.pop %v343
    %v351 = vmul.f32 %v349, %v287
    %353 = vrot.lane.b32.xlu0 %v350, 64
    %v354 = vpop.permute.xlu0 %353
    %v356 = vmul.f32 %v349, %v354
    %358 = vrot.lane.b32.xlu0 %v356, 32
    %v359 = vpop.permute.xlu0 %358
    %v361 = vadd.f32 %v351, %v359
    %v362 = vtanh.pop %v361
    %364 = vrot.lane.b32.xlu0 %v362, 64
    %v365 = vpop.permute.xlu0 %364
    %v367 = vmul.f32 %v349, %v365
    %s368 = scalar_lea.vmem [#allocation2], 8
    %v369 = vld [vmem:[%s368] sm:$0x3]
    %v370 = vpack.c.bf16 %v367, %v367
    %372 = vrot.lane.b32.xlu0 %v370, 32
    %v373 = vpop.permute.xlu0 %372
    %v375 = vsel %vm77, %v373, 0
    %377 = vmatprep.subr.bf16.mxu0 0
    %378 = vmatpush1.bf16.msra.mxu0 %v73
    %379 = vmatprep.subr.bf16.mxu0 0
    %380 = vmatpush1.bf16.msra.mxu0 %v74
    %381 = vmatprep.subr.bf16.mxu0 0
    %382 = vmatpush1.bf16.msra.mxu0 0
    %383 = vmatprep.subr.bf16.mxu0 0
    %384 = vmatpush1.bf16.msra.mxu0 0
    %385 = vmatprep.subr.bf16.mxu0 0
    %386 = vmatpush1.bf16.msra.mxu0 0
    %387 = vmatprep.subr.bf16.mxu0 0
    %388 = vmatpush1.bf16.msra.mxu0 0
    %389 = vmatprep.subr.bf16.mxu0 0
    %390 = vmatpush1.bf16.msra.mxu0 0
    %391 = vmatprep.subr.bf16.mxu0 0
    %392 = vmatpush1.bf16.msra.mxu0 0
    %393 = vmatprep.subr.bf16.mxu0 0
    %394 = vmatpush1.bf16.msra.mxu0 0
    %395 = vmatprep.subr.bf16.mxu0 0
    %396 = vmatpush1.bf16.msra.mxu0 0
    %397 = vmatprep.subr.bf16.mxu0 0
    %398 = vmatpush1.bf16.msra.mxu0 0
    %399 = vmatprep.subr.bf16.mxu0 0
    %400 = vmatpush1.bf16.msra.mxu0 0
    %401 = vmatprep.subr.bf16.mxu0 0
    %402 = vmatpush1.bf16.msra.mxu0 0
    %403 = vmatprep.subr.bf16.mxu0 0
    %404 = vmatpush1.bf16.msra.mxu0 0
    %405 = vmatprep.subr.bf16.mxu0 0
    %406 = vmatpush1.bf16.msra.mxu0 0
    %407 = vmatprep.subr.bf16.mxu0 0
    %408 = vmatpush1.bf16.msra.mxu0 0
    %409 = vmatprep.mubr.bf16.mxu0 0
    %410 = vmatmul.mubr.bf16.gmra.mrb[0].mxu0 %v375
    %v411 = vpop.f32.mrb[0].mxu0
    %v412 = vadd.f32 0.0, %v411
    %v413 = vpop.f32.mrb[0].mxu0
    %v414 = vpop.f32.mrb[0].mxu0
    %v415 = vpop.f32.mrb[0].mxu0
    %416 = vdwg.mxu0
    %v417 = vadd.f32 %v369, %v412
    %v418 = vxor.u32 %v417, 2147483648
    %v419 = vmul.f32 %v418, 1.442695
    %v420 = vpow.pop %v419
    %v421 = vadd.f32 %v420, 1.0
    %v422 = vrcp.pop %v421
    %v423 = vmul.f32 1.0, %v422
    %v424 = vtanh.pop %v417
    %v425 = vmul.f32 %v423, %v361
    %427 = vrot.lane.b32.xlu0 %v424, 64
    %v428 = vpop.permute.xlu0 %427
    %v430 = vmul.f32 %v423, %v428
    %432 = vrot.lane.b32.xlu0 %v430, 32
    %v433 = vpop.permute.xlu0 %432
    %v435 = vadd.f32 %v425, %v433
    %v436 = vtanh.pop %v435
    %438 = vrot.lane.b32.xlu0 %v436, 64
    %v439 = vpop.permute.xlu0 %438
    %v441 = vmul.f32 %v423, %v439
    %s442 = scalar_lea.vmem [#allocation2], 10
    %v443 = vld [vmem:[%s442] sm:$0x3]
    %v444 = vpack.c.bf16 %v441, %v441
    %446 = vrot.lane.b32.xlu0 %v444, 32
    %v447 = vpop.permute.xlu0 %446
    %v449 = vsel %vm77, %v447, 0
    %451 = vmatprep.subr.bf16.mxu0 0
    %452 = vmatpush1.bf16.msra.mxu0 %v73
    %453 = vmatprep.subr.bf16.mxu0 0
    %454 = vmatpush1.bf16.msra.mxu0 %v74
    %455 = vmatprep.subr.bf16.mxu0 0
    %456 = vmatpush1.bf16.msra.mxu0 0
    %457 = vmatprep.subr.bf16.mxu0 0
    %458 = vmatpush1.bf16.msra.mxu0 0
    %459 = vmatprep.subr.bf16.mxu0 0
    %460 = vmatpush1.bf16.msra.mxu0 0
    %461 = vmatprep.subr.bf16.mxu0 0
    %462 = vmatpush1.bf16.msra.mxu0 0
    %463 = vmatprep.subr.bf16.mxu0 0
    %464 = vmatpush1.bf16.msra.mxu0 0
    %465 = vmatprep.subr.bf16.mxu0 0
    %466 = vmatpush1.bf16.msra.mxu0 0
    %467 = vmatprep.subr.bf16.mxu0 0
    %468 = vmatpush1.bf16.msra.mxu0 0
    %469 = vmatprep.subr.bf16.mxu0 0
    %470 = vmatpush1.bf16.msra.mxu0 0
    %471 = vmatprep.subr.bf16.mxu0 0
    %472 = vmatpush1.bf16.msra.mxu0 0
    %473 = vmatprep.subr.bf16.mxu0 0
    %474 = vmatpush1.bf16.msra.mxu0 0
    %475 = vmatprep.subr.bf16.mxu0 0
    %476 = vmatpush1.bf16.msra.mxu0 0
    %477 = vmatprep.subr.bf16.mxu0 0
    %478 = vmatpush1.bf16.msra.mxu0 0
    %479 = vmatprep.subr.bf16.mxu0 0
    %480 = vmatpush1.bf16.msra.mxu0 0
    %481 = vmatprep.subr.bf16.mxu0 0
    %482 = vmatpush1.bf16.msra.mxu0 0
    %483 = vmatprep.mubr.bf16.mxu0 0
    %484 = vmatmul.mubr.bf16.gmra.mrb[0].mxu0 %v449
    %v485 = vpop.f32.mrb[0].mxu0
    %v486 = vadd.f32 0.0, %v485
    %v487 = vpop.f32.mrb[0].mxu0
    %v488 = vpop.f32.mrb[0].mxu0
    %v489 = vpop.f32.mrb[0].mxu0
    %490 = vdwg.mxu0
    %v491 = vadd.f32 %v443, %v486
    %v492 = vxor.u32 %v491, 2147483648
    %v493 = vmul.f32 %v492, 1.442695
    %v494 = vpow.pop %v493
    %v495 = vadd.f32 %v494, 1.0
    %v496 = vrcp.pop %v495
    %v497 = vmul.f32 1.0, %v496
    %v498 = vtanh.pop %v491
    %v499 = vmul.f32 %v497, %v435
    %501 = vrot.lane.b32.xlu0 %v498, 64
    %v502 = vpop.permute.xlu0 %501
    %v504 = vmul.f32 %v497, %v502
    %506 = vrot.lane.b32.xlu0 %v504, 32
    %v507 = vpop.permute.xlu0 %506
    %v509 = vadd.f32 %v499, %v507
    %v510 = vtanh.pop %v509
    %512 = vrot.lane.b32.xlu0 %v510, 64
    %v513 = vpop.permute.xlu0 %512
    %v515 = vmul.f32 %v497, %v513
    %s516 = scalar_lea.vmem [#allocation2], 12
    %v517 = vld [vmem:[%s516] sm:$0x3]
    %v518 = vpack.c.bf16 %v515, %v515
    %520 = vrot.lane.b32.xlu0 %v518, 32
    %v521 = vpop.permute.xlu0 %520
    %v523 = vsel %vm77, %v521, 0
    %525 = vmatprep.subr.bf16.mxu0 0
    %526 = vmatpush1.bf16.msra.mxu0 %v73
    %527 = vmatprep.subr.bf16.mxu0 0
    %528 = vmatpush1.bf16.msra.mxu0 %v74
    %529 = vmatprep.subr.bf16.mxu0 0
    %530 = vmatpush1.bf16.msra.mxu0 0
    %531 = vmatprep.subr.bf16.mxu0 0
    %532 = vmatpush1.bf16.msra.mxu0 0
    %533 = vmatprep.subr.bf16.mxu0 0
    %534 = vmatpush1.bf16.msra.mxu0 0
    %535 = vmatprep.subr.bf16.mxu0 0
    %536 = vmatpush1.bf16.msra.mxu0 0
    %537 = vmatprep.subr.bf16.mxu0 0
    %538 = vmatpush1.bf16.msra.mxu0 0
    %539 = vmatprep.subr.bf16.mxu0 0
    %540 = vmatpush1.bf16.msra.mxu0 0
    %541 = vmatprep.subr.bf16.mxu0 0
    %542 = vmatpush1.bf16.msra.mxu0 0
    %543 = vmatprep.subr.bf16.mxu0 0
    %544 = vmatpush1.bf16.msra.mxu0 0
    %545 = vmatprep.subr.bf16.mxu0 0
    %546 = vmatpush1.bf16.msra.mxu0 0
    %547 = vmatprep.subr.bf16.mxu0 0
    %548 = vmatpush1.bf16.msra.mxu0 0
    %549 = vmatprep.subr.bf16.mxu0 0
    %550 = vmatpush1.bf16.msra.mxu0 0
    %551 = vmatprep.subr.bf16.mxu0 0
    %552 = vmatpush1.bf16.msra.mxu0 0
    %553 = vmatprep.subr.bf16.mxu0 0
    %554 = vmatpush1.bf16.msra.mxu0 0
    %555 = vmatprep.subr.bf16.mxu0 0
    %556 = vmatpush1.bf16.msra.mxu0 0
    %557 = vmatprep.mubr.bf16.mxu0 0
    %558 = vmatmul.mubr.bf16.gmra.mrb[0].mxu0 %v523
    %v559 = vpop.f32.mrb[0].mxu0
    %v560 = vadd.f32 0.0, %v559
    %v561 = vpop.f32.mrb[0].mxu0
    %v562 = vpop.f32.mrb[0].mxu0
    %v563 = vpop.f32.mrb[0].mxu0
    %564 = vdwg.mxu0
    %v565 = vadd.f32 %v517, %v560
    %v566 = vxor.u32 %v565, 2147483648
    %v567 = vmul.f32 %v566, 1.442695
    %v568 = vpow.pop %v567
    %v569 = vadd.f32 %v568, 1.0
    %v570 = vrcp.pop %v569
    %v571 = vmul.f32 1.0, %v570
    %v572 = vtanh.pop %v565
    %v573 = vmul.f32 %v571, %v509
    %575 = vrot.lane.b32.xlu0 %v572, 64
    %v576 = vpop.permute.xlu0 %575
    %v578 = vmul.f32 %v571, %v576
    %580 = vrot.lane.b32.xlu0 %v578, 32
    %v581 = vpop.permute.xlu0 %580
    %v583 = vadd.f32 %v573, %v581
    %v584 = vtanh.pop %v583
    %586 = vrot.lane.b32.xlu0 %v584, 64
    %v587 = vpop.permute.xlu0 %586
    %v589 = vmul.f32 %v571, %v587
    %s590 = scalar_lea.vmem [#allocation2], 14
    %v591 = vld [vmem:[%s590] sm:$0x3]
    %v592 = vpack.c.bf16 %v589, %v589
    %594 = vrot.lane.b32.xlu0 %v592, 32
    %v595 = vpop.permute.xlu0 %594
    %v597 = vsel %vm77, %v595, 0
    %599 = vmatprep.subr.bf16.mxu0 0
    %600 = vmatpush1.bf16.msra.mxu0 %v73
    %601 = vmatprep.subr.bf16.mxu0 0
    %602 = vmatpush1.bf16.msra.mxu0 %v74
    %603 = vmatprep.subr.bf16.mxu0 0
    %604 = vmatpush1.bf16.msra.mxu0 0
    %605 = vmatprep.subr.bf16.mxu0 0
    %606 = vmatpush1.bf16.msra.mxu0 0
    %607 = vmatprep.subr.bf16.mxu0 0
    %608 = vmatpush1.bf16.msra.mxu0 0
    %609 = vmatprep.subr.bf16.mxu0 0
    %610 = vmatpush1.bf16.msra.mxu0 0
    %611 = vmatprep.subr.bf16.mxu0 0
    %612 = vmatpush1.bf16.msra.mxu0 0
    %613 = vmatprep.subr.bf16.mxu0 0
    %614 = vmatpush1.bf16.msra.mxu0 0
    %615 = vmatprep.subr.bf16.mxu0 0
    %616 = vmatpush1.bf16.msra.mxu0 0
    %617 = vmatprep.subr.bf16.mxu0 0
    %618 = vmatpush1.bf16.msra.mxu0 0
    %619 = vmatprep.subr.bf16.mxu0 0
    %620 = vmatpush1.bf16.msra.mxu0 0
    %621 = vmatprep.subr.bf16.mxu0 0
    %622 = vmatpush1.bf16.msra.mxu0 0
    %623 = vmatprep.subr.bf16.mxu0 0
    %624 = vmatpush1.bf16.msra.mxu0 0
    %625 = vmatprep.subr.bf16.mxu0 0
    %626 = vmatpush1.bf16.msra.mxu0 0
    %627 = vmatprep.subr.bf16.mxu0 0
    %628 = vmatpush1.bf16.msra.mxu0 0
    %629 = vmatprep.subr.bf16.mxu0 0
    %630 = vmatpush1.bf16.msra.mxu0 0
    %631 = vmatprep.mubr.bf16.mxu0 0
    %632 = vmatmul.mubr.bf16.gmra.mrb[0].mxu0 %v597
    %v633 = vpop.f32.mrb[0].mxu0
    %v634 = vadd.f32 0.0, %v633
    %v635 = vpop.f32.mrb[0].mxu0
    %v636 = vpop.f32.mrb[0].mxu0
    %v637 = vpop.f32.mrb[0].mxu0
    %638 = vdwg.mxu0
    %v639 = vadd.f32 %v591, %v634
    %v640 = vxor.u32 %v639, 2147483648
    %v641 = vmul.f32 %v640, 1.442695
    %v642 = vpow.pop %v641
    %v643 = vadd.f32 %v642, 1.0
    %v644 = vrcp.pop %v643
    %v645 = vmul.f32 1.0, %v644
    %v646 = vtanh.pop %v639
    %v647 = vmul.f32 %v645, %v583
    %649 = vrot.lane.b32.xlu0 %v646, 64
    %v650 = vpop.permute.xlu0 %649
    %v652 = vmul.f32 %v645, %v650
    %654 = vrot.lane.b32.xlu0 %v652, 32
    %v655 = vpop.permute.xlu0 %654
    %v657 = vadd.f32 %v647, %v655
    %v658 = vtanh.pop %v657
    %660 = vrot.lane.b32.xlu0 %v658, 64
    %v661 = vpop.permute.xlu0 %660
    %v663 = vmul.f32 %v645, %v661
    %v664 = vpack.c.bf16 %v663, %v663
    %v665 = vld [vmem:[#allocation7] sm:$0xf]
    %v666 = vld [vmem:[#allocation7 + $0x4] sm:$0xf]
    %v667 = vld [vmem:[#allocation7 + $0x8] sm:$0xf]
    %v668 = vld [vmem:[#allocation7 + $0xc] sm:$0xf]
    %v669 = vld [vmem:[%s3] sm:$0x1]
    %v671 = vlaneseq
    %v672 = vshrl.u32 %v671, 7
    %v673 = vsub.s32 0, %v672
    %v674 = vrot.slane %v669, %v673
    %677 = vrot.lane.b32.xlu0 %v664, 32
    %v678 = vpop.permute.xlu0 %677
    %v683 = vunpack.c.l.b16 %v665
    %v684 = vunpack.c.l.b16 %v666
    %v685 = vunpack.c.l.b16 %v667
    %v686 = vunpack.c.l.b16 %v668
    %v687 = vpack.c.b16 %v684, %v683
    %v688 = vpack.c.b16 %v686, %v685
    %v692 = vsel %vm77, %v678, 0
    %694 = vmatprep.subr.bf16.mxu0 0
    %695 = vmatpush1.bf16.msra.mxu0 %v687
    %696 = vmatprep.subr.bf16.mxu0 0
    %697 = vmatpush1.bf16.msra.mxu0 %v688
    %698 = vmatprep.subr.bf16.mxu0 0
    %699 = vmatpush1.bf16.msra.mxu0 0
    %700 = vmatprep.subr.bf16.mxu0 0
    %701 = vmatpush1.bf16.msra.mxu0 0
    %702 = vmatprep.subr.bf16.mxu0 0
    %703 = vmatpush1.bf16.msra.mxu0 0
    %704 = vmatprep.subr.bf16.mxu0 0
    %705 = vmatpush1.bf16.msra.mxu0 0
    %706 = vmatprep.subr.bf16.mxu0 0
    %707 = vmatpush1.bf16.msra.mxu0 0
    %708 = vmatprep.subr.bf16.mxu0 0
    %709 = vmatpush1.bf16.msra.mxu0 0
    %710 = vmatprep.subr.bf16.mxu0 0
    %711 = vmatpush1.bf16.msra.mxu0 0
    %712 = vmatprep.subr.bf16.mxu0 0
    %713 = vmatpush1.bf16.msra.mxu0 0
    %714 = vmatprep.subr.bf16.mxu0 0
    %715 = vmatpush1.bf16.msra.mxu0 0
    %716 = vmatprep.subr.bf16.mxu0 0
    %717 = vmatpush1.bf16.msra.mxu0 0
    %718 = vmatprep.subr.bf16.mxu0 0
    %719 = vmatpush1.bf16.msra.mxu0 0
    %720 = vmatprep.subr.bf16.mxu0 0
    %721 = vmatpush1.bf16.msra.mxu0 0
    %722 = vmatprep.subr.bf16.mxu0 0
    %723 = vmatpush1.bf16.msra.mxu0 0
    %724 = vmatprep.subr.bf16.mxu0 0
    %725 = vmatpush1.bf16.msra.mxu0 0
    %726 = vmatprep.mubr.bf16.mxu0 0
    %727 = vmatmul.mubr.bf16.gmra.mrb[0].mxu0 %v692
    %v728 = vpop.f32.mrb[0].mxu0
    %v729 = vadd.f32 %v674, %v728
    %v730 = vpop.f32.mrb[0].mxu0
    %v731 = vpop.f32.mrb[0].mxu0
    %v732 = vpop.f32.mrb[0].mxu0
    %733 = vdwg.mxu0
    %v734 = vlaneseq
    %v735 = vand.u32 %v734, 127
    %vm736 = vcmp.lt.s32.totalorder %v735, 4
    %v737 = vsel %vm736, %v729, -1e+30
    %vm738 = vcmask 1041408
    %v739 = vsel %vm738, %v737, -inf
    %740 = vmax.xlane.f32.xlu0 %v739
    %v741 = vpop.xlane.xlu0 %740
    %v742 = vsub.f32 %v737, %v741
    %v743 = vmul.f32 %v742, 1.442695
    %v744 = vpow.pop %v743
    %v745 = vsel %vm738, %v744, 0.0
    %746 = vadd.xlane.f32.xlu0 %v745
    %v747 = vpop.xlane.xlu0 %746
    %v748 = vlog2.pop %v747
    %v749 = vmul.f32 %v748, 0.6931472
    %v750 = vsub.f32 %v742, %v749
    %751 = vst [vmem:[#allocation8] sm:$0x3] %v750
    // Predicated region
    $region30: #{tpu_custom_call.1} parent=1 // pred_check
      _
    $region31: #{tpu_custom_call.1} parent=1 // pred_check_branch
      %753 = sbr.rel (0) target = $region33
    $region32: #{tpu_custom_call.1} parent=1 // pred_region
      %s755 = ssub.s32 32, 32
      %756 = vsyncadd [#allocation4], %s755
      %s758 = sshll.u32 [#allocation8], 4
      %s759 = int_to_ptr.vmem [resolvable:$true] %s758
      %761 = dma.vmem_to_hbm [thread:$0]  %s759, 32, %s4, [#allocation4]
    $region33: #{tpu_custom_call.1} parent=1 // pred_fallthru
      _
    // Predicated region
    $region34: #{tpu_custom_call.1} parent=1 // pred_check
      _
    $region35: #{tpu_custom_call.1} parent=1 // pred_check_branch
      %763 = sbr.rel (0) target = $region37
    $region36: #{tpu_custom_call.1} parent=1 // pred_region
      %764 = dma.done [#allocation4], 32
    $region37: #{tpu_custom_call.1} parent=1 // pred_fallthru
      _
    %765 = vsyncpa [#allocation3], 1
    %766 = vsyncpa [#allocation6], 1
    %767 = vsyncpa [#allocation4], 1

</llo_original>
